<compile_context>
chip_gen: v6e
topology: v6e:2x2x1
jax: 0.10.0
libtpu: 0.0.40
codegen_flags: <defaults>
</compile_context>

<pallas_src>
import jax
import jax.numpy as jnp
from jax.experimental import pallas as pl
from jax.experimental.pallas import tpu as pltpu
import numpy as np


def lstm_recurrence_kernel(gx_ref, whh_ref, wd_ref, bd_ref, out_ref):
    """Serial LSTM recurrence over precomputed input gates + fused dense head.

    gx_ref : (T, Bp, 4H)  precomputed x_t @ W_ih^T + (b_ih + b_hh)
    whh_ref: (H, 4H)      W_hh^T
    wd_ref : (H, C)       W_dense^T
    bd_ref : (1, C)       dense bias
    out_ref: (Bp, C)      sigmoid(dense(h_T))
    """
    T, Bp, G = gx_ref.shape
    H = whh_ref.shape[0]

    def step(t, carry):
        h, c = carry
        # gates_x[t] is already x_t @ W_ih^T + bias; only the serial part stays here.
        gates = gx_ref[t] + jnp.dot(h, whh_ref[...],
                                    preferred_element_type=jnp.float32)   # (Bp, 4H)
        i = jax.nn.sigmoid(gates[:, 0 * H:1 * H])
        f = jax.nn.sigmoid(gates[:, 1 * H:2 * H])
        g = jnp.tanh(gates[:, 2 * H:3 * H])
        o = jax.nn.sigmoid(gates[:, 3 * H:4 * H])
        c_new = f * c + i * g
        h_new = o * jnp.tanh(c_new)
        return (h_new, c_new)

    h0 = jnp.zeros((Bp, H), jnp.float32)
    c0 = jnp.zeros((Bp, H), jnp.float32)
    h, _ = jax.lax.fori_loop(0, T, step, (h0, c0))

    # Fused dense head + sigmoid on the final hidden state.
    logits = jnp.dot(h, wd_ref[...], preferred_element_type=jnp.float32) + bd_ref[...]
    out_ref[...] = jax.nn.sigmoid(logits)


def lstm_forward(x, params):
    """x: (B, input_dim, T) float32  ->  scores: (B, num_classes) float32."""
    wih_t, whh_t, b, wd_t, bd = params
    B, D, T = x.shape
    H = whh_t.shape[0]
    C = wd_t.shape[1]

    # (B, D, T) -> (T, B, D) time-major.
    x_tm = jnp.transpose(x, (2, 0, 1))

    # Hoisted input projection: one large matmul over all T timesteps + bias fold.
    gates_x = jnp.einsum('tbd,dg->tbg', x_tm, wih_t) + b          # (T, B, 4H)

    # Pad batch up to a sublane multiple so the recurrent matmul fills vreg rows.
    Bp = max(8, ((B + 7) // 8) * 8)
    if Bp != B:
        gates_x = jnp.pad(gates_x, ((0, 0), (0, Bp - B), (0, 0)))

    out = pl.pallas_call(
        lstm_recurrence_kernel,
        out_shape=jax.ShapeDtypeStruct((Bp, C), jnp.float32),
        grid=(1,),                                                 # single step; time loop is in-kernel
        in_specs=[
            pl.BlockSpec((T, Bp, 4 * H), lambda i: (0, 0, 0)),     # gates_x resident in VMEM
            pl.BlockSpec((H, 4 * H), lambda i: (0, 0)),            # W_hh^T
            pl.BlockSpec((H, C), lambda i: (0, 0)),                # W_dense^T
            pl.BlockSpec((1, C), lambda i: (0, 0)),                # b_dense
        ],
        out_specs=pl.BlockSpec((Bp, C), lambda i: (0, 0)),
        compiler_params=pltpu.CompilerParams(
            dimension_semantics=("arbitrary",)),
    )(gates_x, whh_t, wd_t, bd)

    return out[:B]


def init_params(key, input_dim, hidden_dim, num_classes):
    """Deterministic init matching the module's initialize_weights semantics:
    xavier_uniform for W_ih and dense weight, orthogonal for W_hh, zero biases."""
    k1, k2, k3 = jax.random.split(key, 3)
    H, D, C = hidden_dim, input_dim, num_classes

    # W_ih: (4H, D), xavier uniform
    lim_ih = float(np.sqrt(6.0 / (D + 4 * H)))
    w_ih = jax.random.uniform(k1, (4 * H, D), jnp.float32, -lim_ih, lim_ih)

    # W_hh: (4H, H), orthogonal (QR of a gaussian)
    a = jax.random.normal(k2, (4 * H, H), jnp.float32)
    q, r = jnp.linalg.qr(a)
    q = q * jnp.sign(jnp.diagonal(r))[None, :]
    w_hh = q                                               # (4H, H), orthonormal cols

    # biases (b_ih + b_hh) are zero
    b = jnp.zeros((1, 4 * H), jnp.float32)

    # dense: (C, H) xavier uniform, zero bias
    lim_d = float(np.sqrt(6.0 / (H + C)))
    w_d = jax.random.uniform(k3, (C, H), jnp.float32, -lim_d, lim_d)
    b_d = jnp.zeros((1, C), jnp.float32)

    # pre-transpose for the kernel
    return (w_ih.T, w_hh.T, b, w_d.T, b_d)


def reference_forward(x, params):
    """Pure-JAX reference of the PyTorch forward (for verification)."""
    wih_t, whh_t, b, wd_t, bd = params
    B, D, T = x.shape
    H = whh_t.shape[0]
    x_btd = jnp.transpose(x, (0, 2, 1))                    # (B, T, D)

    def step(carry, x_t):
        h, c = carry
        gates = x_t @ wih_t + h @ whh_t + b
        i = jax.nn.sigmoid(gates[:, 0 * H:1 * H])
        f = jax.nn.sigmoid(gates[:, 1 * H:2 * H])
        g = jnp.tanh(gates[:, 2 * H:3 * H])
        o = jax.nn.sigmoid(gates[:, 3 * H:4 * H])
        c = f * c + i * g
        h = o * jnp.tanh(c)
        return (h, c), None

    h0 = jnp.zeros((B, H), jnp.float32)
    c0 = jnp.zeros((B, H), jnp.float32)
    (hT, _), _ = jax.lax.scan(step, (h0, c0), jnp.transpose(x_btd, (1, 0, 2)))
    return jax.nn.sigmoid(hT @ wd_t + bd)


if __name__ == "__main__":
    # Small test shapes consistent with the module: hidden_dim=128 / num_classes=7
    # are the module defaults; input_dim scaled down from 4096 for the test.
    B, D, T = 2, 16, 8        # batch, input_dim, seq_len
    H, C = 128, 7             # hidden_dim, num_classes

    key = jax.random.PRNGKey(0)
    kx, kp = jax.random.split(key)
    x = jax.random.normal(kx, (B, D, T), jnp.float32)      # PyTorch-style (B, C, L)
    params = init_params(kp, D, H, C)

    scores = lstm_forward(x, params)
    scores = jax.block_until_ready(scores)

    ref = reference_forward(x, params)
    np.testing.assert_allclose(np.asarray(scores), np.asarray(ref),
                               rtol=1e-4, atol=1e-5)
    assert scores.shape == (B, C)
    print("KERNEL_OK")
</pallas_src>

<mosaic_0001>
module attributes {stable_mosaic.version = 11 : i64} {
  func.func @lstm_recurrence_kernel(%arg0: i32, %arg1: memref<8x8x512xf32, #tpu.memory_space<vmem>>, %arg2: memref<128x512xf32, #tpu.memory_space<vmem>>, %arg3: memref<128x7xf32, #tpu.memory_space<vmem>>, %arg4: memref<1x7xf32, #tpu.memory_space<vmem>>, %arg5: memref<8x7xf32, #tpu.memory_space<vmem>>) attributes {dimension_semantics = [#tpu.dimension_semantics<arbitrary>], iteration_bounds = array<i64: 1>, scalar_prefetch = 0 : i64, scratch_operands = 0 : i64, tpu.core_type = #tpu.core_type<tc>, window_params = [{pipeline_mode = #tpu.pipeline_mode<synchronous>, transform_indices = @transform_0, window_bounds = array<i64: 8, 8, 512>}, {pipeline_mode = #tpu.pipeline_mode<synchronous>, transform_indices = @transform_1, window_bounds = array<i64: 128, 512>}, {pipeline_mode = #tpu.pipeline_mode<synchronous>, transform_indices = @transform_2, window_bounds = array<i64: 128, 7>}, {pipeline_mode = #tpu.pipeline_mode<synchronous>, transform_indices = @transform_3, window_bounds = array<i64: 1, 7>}, {pipeline_mode = #tpu.pipeline_mode<synchronous>, transform_indices = @transform_4, window_bounds = array<i64: 8, 7>}]} {
    %cst = arith.constant 0.000000e+00 : f32
    %0 = vector.broadcast %cst : f32 to vector<8x128xf32>
    %cst_0 = arith.constant 0.000000e+00 : f32
    %1 = vector.broadcast %cst_0 : f32 to vector<8x128xf32>
    %c0_i32 = arith.constant 0 : i32
    %c8_i32 = arith.constant 8 : i32
    %2 = arith.addi %c0_i32, %c8_i32 : i32
    %c1_i32 = arith.constant 1 : i32
    %3:2 = scf.for %arg6 = %c0_i32 to %2 step %c1_i32 iter_args(%arg7 = %0, %arg8 = %1) -> (vector<8x128xf32>, vector<8x128xf32>)  : i32 {
      %15 = arith.index_cast %arg6 : i32 to index
      %c0_9 = arith.constant 0 : index
      %c0_10 = arith.constant 0 : index
      %16 = vector.load %arg1[%15, %c0_9, %c0_10] : memref<8x8x512xf32, #tpu.memory_space<vmem>>, vector<1x8x512xf32>
      %17 = vector.shape_cast %16 : vector<1x8x512xf32> to vector<8x512xf32>
      %c0_11 = arith.constant 0 : index
      %c0_12 = arith.constant 0 : index
      %18 = vector.load %arg2[%c0_11, %c0_12] : memref<128x512xf32, #tpu.memory_space<vmem>>, vector<128x512xf32>
      %cst_13 = arith.constant dense<0.000000e+00> : vector<8x512xf32>
      %19 = tpu.matmul %arg7, %18, %cst_13 {dimension_numbers = #tpu.dot_dimension_numbers<[1], [0], [0], [1], [0, 0, 1, 1], [], []>} : vector<8x128xf32>, vector<128x512xf32>, vector<8x512xf32> -> vector<8x512xf32>
      %20 = arith.addf %17, %19 : vector<8x512xf32>
      %21 = vector.extract_strided_slice %20 {offsets = [0, 0], sizes = [8, 128], strides = [1, 1]} : vector<8x512xf32> to vector<8x128xf32>
      %22 = arith.negf %21 : vector<8x128xf32>
      %23 = math.exp %22 : vector<8x128xf32>
      %cst_14 = arith.constant 1.000000e+00 : f32
      %24 = vector.broadcast %cst_14 : f32 to vector<8x128xf32>
      %25 = arith.addf %24, %23 : vector<8x128xf32>
      %26 = arith.divf %24, %25 : vector<8x128xf32>
      %27 = vector.extract_strided_slice %20 {offsets = [0, 128], sizes = [8, 128], strides = [1, 1]} : vector<8x512xf32> to vector<8x128xf32>
      %28 = arith.negf %27 : vector<8x128xf32>
      %29 = math.exp %28 : vector<8x128xf32>
      %cst_15 = arith.constant 1.000000e+00 : f32
      %30 = vector.broadcast %cst_15 : f32 to vector<8x128xf32>
      %31 = arith.addf %30, %29 : vector<8x128xf32>
      %32 = arith.divf %30, %31 : vector<8x128xf32>
      %33 = vector.extract_strided_slice %20 {offsets = [0, 256], sizes = [8, 128], strides = [1, 1]} : vector<8x512xf32> to vector<8x128xf32>
      %34 = math.tanh %33 : vector<8x128xf32>
      %35 = vector.extract_strided_slice %20 {offsets = [0, 384], sizes = [8, 128], strides = [1, 1]} : vector<8x512xf32> to vector<8x128xf32>
      %36 = arith.negf %35 : vector<8x128xf32>
      %37 = math.exp %36 : vector<8x128xf32>
      %cst_16 = arith.constant 1.000000e+00 : f32
      %38 = vector.broadcast %cst_16 : f32 to vector<8x128xf32>
      %39 = arith.addf %38, %37 : vector<8x128xf32>
      %40 = arith.divf %38, %39 : vector<8x128xf32>
      %41 = arith.mulf %32, %arg8 : vector<8x128xf32>
      %42 = arith.mulf %26, %34 : vector<8x128xf32>
      %43 = arith.addf %41, %42 : vector<8x128xf32>
      %44 = math.tanh %43 : vector<8x128xf32>
      %45 = arith.mulf %40, %44 : vector<8x128xf32>
      scf.yield %45, %43 : vector<8x128xf32>, vector<8x128xf32>
    }
    %c8_i32_1 = arith.constant 8 : i32
    %c0 = arith.constant 0 : index
    %c0_2 = arith.constant 0 : index
    %4 = vector.load %arg3[%c0, %c0_2] : memref<128x7xf32, #tpu.memory_space<vmem>>, vector<128x7xf32>
    %cst_3 = arith.constant dense<0.000000e+00> : vector<8x7xf32>
    %5 = tpu.matmul %3#0, %4, %cst_3 {dimension_numbers = #tpu.dot_dimension_numbers<[1], [0], [0], [1], [0, 0, 1, 1], [], []>} : vector<8x128xf32>, vector<128x7xf32>, vector<8x7xf32> -> vector<8x7xf32>
    %c0_4 = arith.constant 0 : index
    %c0_5 = arith.constant 0 : index
    %6 = vector.load %arg4[%c0_4, %c0_5] : memref<1x7xf32, #tpu.memory_space<vmem>>, vector<1x7xf32>
    %7 = vector.broadcast %6 : vector<1x7xf32> to vector<8x7xf32>
    %8 = arith.addf %5, %7 : vector<8x7xf32>
    %9 = arith.negf %8 : vector<8x7xf32>
    %10 = math.exp %9 : vector<8x7xf32>
    %cst_6 = arith.constant 1.000000e+00 : f32
    %11 = vector.broadcast %cst_6 : f32 to vector<8x7xf32>
    %12 = arith.addf %11, %10 : vector<8x7xf32>
    %13 = arith.divf %11, %12 : vector<8x7xf32>
    %c0_7 = arith.constant 0 : index
    %c0_8 = arith.constant 0 : index
    %14 = vector.load %arg5[%c0_7, %c0_8] : memref<8x7xf32, #tpu.memory_space<vmem>>, vector<8x7xf32>
    tpu.vector_store %arg5[%c0_7, %c0_8], %13 {strides = array<i32>} : memref<8x7xf32, #tpu.memory_space<vmem>>, vector<8x7xf32>,
    return
  }
  func.func @transform_0(%arg0: i32) -> (i32, i32, i32) {
    %c0_i32 = arith.constant 0 : i32
    %c0_i32_0 = arith.constant 0 : i32
    %c0_i32_1 = arith.constant 0 : i32
    %c0_i32_2 = arith.constant 0 : i32
    return %c0_i32, %c0_i32_0, %c0_i32_1 : i32, i32, i32
  }
  func.func @transform_1(%arg0: i32) -> (i32, i32) {
    %c0_i32 = arith.constant 0 : i32
    %c0_i32_0 = arith.constant 0 : i32
    %c0_i32_1 = arith.constant 0 : i32
    return %c0_i32, %c0_i32_0 : i32, i32
  }
  func.func @transform_2(%arg0: i32) -> (i32, i32) {
    %c0_i32 = arith.constant 0 : i32
    %c0_i32_0 = arith.constant 0 : i32
    %c0_i32_1 = arith.constant 0 : i32
    return %c0_i32, %c0_i32_0 : i32, i32
  }
  func.func @transform_3(%arg0: i32) -> (i32, i32) {
    %c0_i32 = arith.constant 0 : i32
    %c0_i32_0 = arith.constant 0 : i32
    %c0_i32_1 = arith.constant 0 : i32
    return %c0_i32, %c0_i32_0 : i32, i32
  }
  func.func @transform_4(%arg0: i32) -> (i32, i32) {
    %c0_i32 = arith.constant 0 : i32
    %c0_i32_0 = arith.constant 0 : i32
    %c0_i32_1 = arith.constant 0 : i32
    return %c0_i32, %c0_i32_0 : i32, i32
  }
}

</mosaic_0001>

<llo_original>
// kernel: tpu_custom_call.1
$region0: #{tpu_custom_call.1}
  #allocation0 [shape = 'u32[]', space=smem, size = 0x4, offset = 0x4, fixed_abs, tag = 'smem constant byte address 0x4 - core index']
  #allocation1 [shape = 'u32[144,128]{1,0:T(1,128)}', space=vmem, size = 0x12000, scoped, tag = 'internal scratch']
  %s0 = inlined_call_operand.hbm [shape: f32[8,8,512], index: 0, kind: input, shape index: {}]
  %s1 = inlined_call_operand.hbm [shape: f32[128,512], index: 1, kind: input, shape index: {}]
  %s2 = inlined_call_operand.vmem [shape: f32[128,7], index: 2, kind: input, shape index: {}]
  %s3 = inlined_call_operand.vmem [shape: f32[1,7], index: 3, kind: input, shape index: {}]
  %s4 = inlined_call_operand.hbm [shape: f32[8,7], index: 4, kind: output, shape index: {}]
  %s5 = sld [smem:[#allocation0]]
  $region41: #{tpu_custom_call.1} parent=0
    _
  %s7 = ssub.s32 1, %s5
  %s8 = scalar_select 0, %s7, %s5
  $region1: #{tpu_custom_call.1} parent=0
    #allocation2 [shape = 'u8[131072]{0}', space=vmem, size = 0x20000, scoped, tag = 'input window, operand 0, single buffered']
    #allocation3 [shape = 's32[1]{0}', space=sflag, size = 0x4, scoped, tag = 'scoped memory for tpu_custom_call.1']
    #allocation4 [shape = 's32[1]{0}', space=sflag, size = 0x4, scoped, tag = 'scoped memory for tpu_custom_call.1']
    #allocation5 [shape = 'u8[262144]{0}', space=vmem, size = 0x40000, scoped, tag = 'input window, operand 1, single buffered']
    #allocation6 [shape = 's32[1]{0}', space=sflag, size = 0x4, scoped, tag = 'scoped memory for tpu_custom_call.1']
    #allocation7 [shape = 'u8[4096]{0}', space=vmem, size = 0x1000, scoped, tag = 'output window, operand 0, single buffered']
    %9 = vsyncpa [#allocation3], 0
    %10 = vsyncpa [#allocation6], 0
    %11 = vsyncpa [#allocation4], 0
    // Predicated region
    $region2: #{tpu_custom_call.1} parent=1 // pred_check
      _
    $region3: #{tpu_custom_call.1} parent=1 // pred_check_branch
      %13 = sbr.rel (0) target = $region5
    $region4: #{tpu_custom_call.1} parent=1 // pred_region
      %s15 = ssub.s32 4096, 4096
      %16 = vsyncadd [#allocation3], %s15
      %s17 = sshll.u32 [#allocation2], 4
      %s18 = int_to_ptr.vmem [resolvable:$true] %s17
      %23 = dma.hbm_to_vmem [thread:$0]  %s0, 4096, %s18, [#allocation3], 512, 512, 32
    $region5: #{tpu_custom_call.1} parent=1 // pred_fallthru
      _
    // Predicated region
    $region6: #{tpu_custom_call.1} parent=1 // pred_check
      _
    $region7: #{tpu_custom_call.1} parent=1 // pred_check_branch
      %25 = sbr.rel (0) target = $region9
    $region8: #{tpu_custom_call.1} parent=1 // pred_region
      %s27 = ssub.s32 8192, 8192
      %28 = vsyncadd [#allocation6], %s27
      %s29 = sshll.u32 [#allocation5], 4
      %s30 = int_to_ptr.vmem [resolvable:$true] %s29
      %35 = dma.hbm_to_vmem [thread:$0]  %s1, 8192, %s30, [#allocation6], 512, 512, 32
    $region9: #{tpu_custom_call.1} parent=1 // pred_fallthru
      _
    // Predicated region
    $region10: #{tpu_custom_call.1} parent=1 // pred_check
      _
    $region11: #{tpu_custom_call.1} parent=1 // pred_check_branch
      %37 = sbr.rel (0) target = $region13
    $region12: #{tpu_custom_call.1} parent=1 // pred_region
      _
    $region13: #{tpu_custom_call.1} parent=1 // pred_fallthru
      _
    // Predicated region
    $region14: #{tpu_custom_call.1} parent=1 // pred_check
      _
    $region15: #{tpu_custom_call.1} parent=1 // pred_check_branch
      %39 = sbr.rel (0) target = $region17
    $region16: #{tpu_custom_call.1} parent=1 // pred_region
      _
    $region17: #{tpu_custom_call.1} parent=1 // pred_fallthru
      _
    // Predicated region
    $region18: #{tpu_custom_call.1} parent=1 // pred_check
      _
    $region19: #{tpu_custom_call.1} parent=1 // pred_check_branch
      %41 = sbr.rel (0) target = $region21
    $region20: #{tpu_custom_call.1} parent=1 // pred_region
      %42 = dma.done [#allocation3], 4096
    $region21: #{tpu_custom_call.1} parent=1 // pred_fallthru
      _
    // Predicated region
    $region22: #{tpu_custom_call.1} parent=1 // pred_check
      _
    $region23: #{tpu_custom_call.1} parent=1 // pred_check_branch
      %44 = sbr.rel (0) target = $region25
    $region24: #{tpu_custom_call.1} parent=1 // pred_region
      %45 = dma.done [#allocation6], 8192
    $region25: #{tpu_custom_call.1} parent=1 // pred_fallthru
      _
    loop: start=0, step=1, limit=8
    $region26: #{tpu_custom_call.1} parent=1 // loop_pre_header
      _
    $region27: #{tpu_custom_call.1} parent=1 // loop_header
      %s47 = sphi 0, %s51
      %p48 = scmp.ge.s32.totalorder %s47, 8
      %v52 = vphi 0.0, %v294
      %v53 = vphi 0.0, %v292
    $region28: #{tpu_custom_call.1} parent=1 // loop_header_branch
      %50 = sbr.rel (%p48) target = $region32
    $region29: #{tpu_custom_call.1} parent=1 // loop_body
      %s54 = smul.u32 %s47, 4
      %s55 = smul.addr %s54, 8
      %s56 = scalar_lea.vmem [#allocation2], %s55
      %v57 = vld [vmem:[%s56] sm:$0xff]
      %v58 = vld [vmem:[%s56 + $0x8] sm:$0xff]
      %v59 = vld [vmem:[%s56 + $0x10] sm:$0xff]
      %v60 = vld [vmem:[%s56 + $0x18] sm:$0xff]
      %v61 = vld [vmem:[#allocation5] sm:$0xff]
      %v62 = vld [vmem:[#allocation5 + $0x8] sm:$0xff]
      %v63 = vld [vmem:[#allocation5 + $0x10] sm:$0xff]
      %v64 = vld [vmem:[#allocation5 + $0x18] sm:$0xff]
      %v65 = vld [vmem:[#allocation5 + $0x20] sm:$0xff]
      %v66 = vld [vmem:[#allocation5 + $0x28] sm:$0xff]
      %v67 = vld [vmem:[#allocation5 + $0x30] sm:$0xff]
      %v68 = vld [vmem:[#allocation5 + $0x38] sm:$0xff]
      %v69 = vld [vmem:[#allocation5 + $0x40] sm:$0xff]
      %v70 = vld [vmem:[#allocation5 + $0x48] sm:$0xff]
      %v71 = vld [vmem:[#allocation5 + $0x50] sm:$0xff]
      %v72 = vld [vmem:[#allocation5 + $0x58] sm:$0xff]
      %v73 = vld [vmem:[#allocation5 + $0x60] sm:$0xff]
      %v74 = vld [vmem:[#allocation5 + $0x68] sm:$0xff]
      %v75 = vld [vmem:[#allocation5 + $0x70] sm:$0xff]
      %v76 = vld [vmem:[#allocation5 + $0x78] sm:$0xff]
      %v77 = vld [vmem:[#allocation5 + $0x80] sm:$0xff]
      %v78 = vld [vmem:[#allocation5 + $0x88] sm:$0xff]
      %v79 = vld [vmem:[#allocation5 + $0x90] sm:$0xff]
      %v80 = vld [vmem:[#allocation5 + $0x98] sm:$0xff]
      %v81 = vld [vmem:[#allocation5 + $0xa0] sm:$0xff]
      %v82 = vld [vmem:[#allocation5 + $0xa8] sm:$0xff]
      %v83 = vld [vmem:[#allocation5 + $0xb0] sm:$0xff]
      %v84 = vld [vmem:[#allocation5 + $0xb8] sm:$0xff]
      %v85 = vld [vmem:[#allocation5 + $0xc0] sm:$0xff]
      %v86 = vld [vmem:[#allocation5 + $0xc8] sm:$0xff]
      %v87 = vld [vmem:[#allocation5 + $0xd0] sm:$0xff]
      %v88 = vld [vmem:[#allocation5 + $0xd8] sm:$0xff]
      %v89 = vld [vmem:[#allocation5 + $0xe0] sm:$0xff]
      %v90 = vld [vmem:[#allocation5 + $0xe8] sm:$0xff]
      %v91 = vld [vmem:[#allocation5 + $0xf0] sm:$0xff]
      %v92 = vld [vmem:[#allocation5 + $0xf8] sm:$0xff]
      %v93 = vld [vmem:[#allocation5 + $0x100] sm:$0xff]
      %v94 = vld [vmem:[#allocation5 + $0x108] sm:$0xff]
      %v95 = vld [vmem:[#allocation5 + $0x110] sm:$0xff]
      %v96 = vld [vmem:[#allocation5 + $0x118] sm:$0xff]
      %v97 = vld [vmem:[#allocation5 + $0x120] sm:$0xff]
      %v98 = vld [vmem:[#allocation5 + $0x128] sm:$0xff]
      %v99 = vld [vmem:[#allocation5 + $0x130] sm:$0xff]
      %v100 = vld [vmem:[#allocation5 + $0x138] sm:$0xff]
      %v101 = vld [vmem:[#allocation5 + $0x140] sm:$0xff]
      %v102 = vld [vmem:[#allocation5 + $0x148] sm:$0xff]
      %v103 = vld [vmem:[#allocation5 + $0x150] sm:$0xff]
      %v104 = vld [vmem:[#allocation5 + $0x158] sm:$0xff]
      %v105 = vld [vmem:[#allocation5 + $0x160] sm:$0xff]
      %v106 = vld [vmem:[#allocation5 + $0x168] sm:$0xff]
      %v107 = vld [vmem:[#allocation5 + $0x170] sm:$0xff]
      %v108 = vld [vmem:[#allocation5 + $0x178] sm:$0xff]
      %v109 = vld [vmem:[#allocation5 + $0x180] sm:$0xff]
      %v110 = vld [vmem:[#allocation5 + $0x188] sm:$0xff]
      %v111 = vld [vmem:[#allocation5 + $0x190] sm:$0xff]
      %v112 = vld [vmem:[#allocation5 + $0x198] sm:$0xff]
      %v113 = vld [vmem:[#allocation5 + $0x1a0] sm:$0xff]
      %v114 = vld [vmem:[#allocation5 + $0x1a8] sm:$0xff]
      %v115 = vld [vmem:[#allocation5 + $0x1b0] sm:$0xff]
      %v116 = vld [vmem:[#allocation5 + $0x1b8] sm:$0xff]
      %v117 = vld [vmem:[#allocation5 + $0x1c0] sm:$0xff]
      %v118 = vld [vmem:[#allocation5 + $0x1c8] sm:$0xff]
      %v119 = vld [vmem:[#allocation5 + $0x1d0] sm:$0xff]
      %v120 = vld [vmem:[#allocation5 + $0x1d8] sm:$0xff]
      %v121 = vld [vmem:[#allocation5 + $0x1e0] sm:$0xff]
      %v122 = vld [vmem:[#allocation5 + $0x1e8] sm:$0xff]
      %v123 = vld [vmem:[#allocation5 + $0x1f0] sm:$0xff]
      %v124 = vld [vmem:[#allocation5 + $0x1f8] sm:$0xff]
      %125 = vmatprep.subr.mxu0 %v122
      %126 = vmatpush1.msra.mxu0 %v121
      %127 = vmatprep.subr.mxu0 %v118
      %128 = vmatpush1.msra.mxu0 %v117
      %129 = vmatprep.subr.mxu0 %v114
      %130 = vmatpush1.msra.mxu0 %v113
      %131 = vmatprep.subr.mxu0 %v110
      %132 = vmatpush1.msra.mxu0 %v109
      %133 = vmatprep.subr.mxu0 %v106
      %134 = vmatpush1.msra.mxu0 %v105
      %135 = vmatprep.subr.mxu0 %v102
      %136 = vmatpush1.msra.mxu0 %v101
      %137 = vmatprep.subr.mxu0 %v98
      %138 = vmatpush1.msra.mxu0 %v97
      %139 = vmatprep.subr.mxu0 %v94
      %140 = vmatpush1.msra.mxu0 %v93
      %141 = vmatprep.subr.mxu0 %v90
      %142 = vmatpush1.msra.mxu0 %v89
      %143 = vmatprep.subr.mxu0 %v86
      %144 = vmatpush1.msra.mxu0 %v85
      %145 = vmatprep.subr.mxu0 %v82
      %146 = vmatpush1.msra.mxu0 %v81
      %147 = vmatprep.subr.mxu0 %v78
      %148 = vmatpush1.msra.mxu0 %v77
      %149 = vmatprep.subr.mxu0 %v74
      %150 = vmatpush1.msra.mxu0 %v73
      %151 = vmatprep.subr.mxu0 %v70
      %152 = vmatpush1.msra.mxu0 %v69
      %153 = vmatprep.subr.mxu0 %v66
      %154 = vmatpush1.msra.mxu0 %v65
      %155 = vmatprep.subr.mxu0 %v62
      %156 = vmatpush1.msra.mxu0 %v61
      %157 = vmatprep.subr.mxu0 0.0
      %158 = vmatpush2.msra.mxu0 0.0
      %159 = vmatprep.subr.mxu0 0.0
      %160 = vmatpush2.msra.mxu0 0.0
      %161 = vmatprep.subr.mxu0 0.0
      %162 = vmatpush2.msra.mxu0 0.0
      %163 = vmatprep.subr.mxu0 0.0
      %164 = vmatpush2.msra.mxu0 0.0
      %165 = vmatprep.subr.mxu0 0.0
      %166 = vmatpush2.msra.mxu0 0.0
      %167 = vmatprep.subr.mxu0 0.0
      %168 = vmatpush2.msra.mxu0 0.0
      %169 = vmatprep.subr.mxu0 0.0
      %170 = vmatpush2.msra.mxu0 0.0
      %171 = vmatprep.subr.mxu0 0.0
      %172 = vmatpush2.msra.mxu0 0.0
      %173 = vmatprep.subr.mxu0 0.0
      %174 = vmatpush2.msra.mxu0 0.0
      %175 = vmatprep.subr.mxu0 0.0
      %176 = vmatpush2.msra.mxu0 0.0
      %177 = vmatprep.subr.mxu0 0.0
      %178 = vmatpush2.msra.mxu0 0.0
      %179 = vmatprep.subr.mxu0 0.0
      %180 = vmatpush2.msra.mxu0 0.0
      %181 = vmatprep.subr.mxu0 0.0
      %182 = vmatpush2.msra.mxu0 0.0
      %183 = vmatprep.subr.mxu0 0.0
      %184 = vmatpush2.msra.mxu0 0.0
      %185 = vmatprep.subr.mxu0 0.0
      %186 = vmatpush2.msra.mxu0 0.0
      %187 = vmatprep.subr.mxu0 0.0
      %188 = vmatpush2.msra.mxu0 0.0
      %189 = vmatprep.mubr.f32.mxu0 0.0
      %190 = vmatmul.mubr.f32.gmra.mxu0 %v52
      %v191 = vpop.f32.mrf.mxu0
      %v192 = vadd.f32 0.0, %v191
      %v193 = vpop.f32.mrf.mxu0
      %v194 = vadd.f32 0.0, %v193
      %195 = vdwg.mxu0
      %196 = vmatprep.subr.mxu0 %v124
      %197 = vmatpush1.msra.mxu0 %v123
      %198 = vmatprep.subr.mxu0 %v120
      %199 = vmatpush1.msra.mxu0 %v119
      %200 = vmatprep.subr.mxu0 %v116
      %201 = vmatpush1.msra.mxu0 %v115
      %202 = vmatprep.subr.mxu0 %v112
      %203 = vmatpush1.msra.mxu0 %v111
      %204 = vmatprep.subr.mxu0 %v108
      %205 = vmatpush1.msra.mxu0 %v107
      %206 = vmatprep.subr.mxu0 %v104
      %207 = vmatpush1.msra.mxu0 %v103
      %208 = vmatprep.subr.mxu0 %v100
      %209 = vmatpush1.msra.mxu0 %v99
      %210 = vmatprep.subr.mxu0 %v96
      %211 = vmatpush1.msra.mxu0 %v95
      %212 = vmatprep.subr.mxu0 %v92
      %213 = vmatpush1.msra.mxu0 %v91
      %214 = vmatprep.subr.mxu0 %v88
      %215 = vmatpush1.msra.mxu0 %v87
      %216 = vmatprep.subr.mxu0 %v84
      %217 = vmatpush1.msra.mxu0 %v83
      %218 = vmatprep.subr.mxu0 %v80
      %219 = vmatpush1.msra.mxu0 %v79
      %220 = vmatprep.subr.mxu0 %v76
      %221 = vmatpush1.msra.mxu0 %v75
      %222 = vmatprep.subr.mxu0 %v72
      %223 = vmatpush1.msra.mxu0 %v71
      %224 = vmatprep.subr.mxu0 %v68
      %225 = vmatpush1.msra.mxu0 %v67
      %226 = vmatprep.subr.mxu0 %v64
      %227 = vmatpush1.msra.mxu0 %v63
      %228 = vmatprep.subr.mxu0 0.0
      %229 = vmatpush2.msra.mxu0 0.0
      %230 = vmatprep.subr.mxu0 0.0
      %231 = vmatpush2.msra.mxu0 0.0
      %232 = vmatprep.subr.mxu0 0.0
      %233 = vmatpush2.msra.mxu0 0.0
      %234 = vmatprep.subr.mxu0 0.0
      %235 = vmatpush2.msra.mxu0 0.0
      %236 = vmatprep.subr.mxu0 0.0
      %237 = vmatpush2.msra.mxu0 0.0
      %238 = vmatprep.subr.mxu0 0.0
      %239 = vmatpush2.msra.mxu0 0.0
      %240 = vmatprep.subr.mxu0 0.0
      %241 = vmatpush2.msra.mxu0 0.0
      %242 = vmatprep.subr.mxu0 0.0
      %243 = vmatpush2.msra.mxu0 0.0
      %244 = vmatprep.subr.mxu0 0.0
      %245 = vmatpush2.msra.mxu0 0.0
      %246 = vmatprep.subr.mxu0 0.0
      %247 = vmatpush2.msra.mxu0 0.0
      %248 = vmatprep.subr.mxu0 0.0
      %249 = vmatpush2.msra.mxu0 0.0
      %250 = vmatprep.subr.mxu0 0.0
      %251 = vmatpush2.msra.mxu0 0.0
      %252 = vmatprep.subr.mxu0 0.0
      %253 = vmatpush2.msra.mxu0 0.0
      %254 = vmatprep.subr.mxu0 0.0
      %255 = vmatpush2.msra.mxu0 0.0
      %256 = vmatprep.subr.mxu0 0.0
      %257 = vmatpush2.msra.mxu0 0.0
      %258 = vmatprep.subr.mxu0 0.0
      %259 = vmatpush2.msra.mxu0 0.0
      %260 = vmatprep.mubr.f32.mxu0 0.0
      %261 = vmatmul.mubr.f32.gmra.mxu0 %v52
      %v262 = vpop.f32.mrf.mxu0
      %v263 = vadd.f32 0.0, %v262
      %v264 = vpop.f32.mrf.mxu0
      %v265 = vadd.f32 0.0, %v264
      %266 = vdwg.mxu0
      %v267 = vadd.f32 %v57, %v192
      %v268 = vadd.f32 %v58, %v194
      %v269 = vadd.f32 %v59, %v263
      %v270 = vadd.f32 %v60, %v265
      %v271 = vxor.u32 %v267, 2147483648
      %v272 = vmul.f32 %v271, 1.442695
      %v273 = vpow.pop %v272
      %v274 = vadd.f32 %v273, 1.0
      %v275 = vrcp.pop %v274
      %v276 = vmul.f32 1.0, %v275
      %v277 = vxor.u32 %v268, 2147483648
      %v278 = vmul.f32 %v277, 1.442695
      %v279 = vpow.pop %v278
      %v280 = vadd.f32 %v279, 1.0
      %v281 = vrcp.pop %v280
      %v282 = vmul.f32 1.0, %v281
      %v283 = vtanh.pop %v269
      %v284 = vxor.u32 %v270, 2147483648
      %v285 = vmul.f32 %v284, 1.442695
      %v286 = vpow.pop %v285
      %v287 = vadd.f32 %v286, 1.0
      %v288 = vrcp.pop %v287
      %v289 = vmul.f32 1.0, %v288
      %v290 = vmul.f32 %v282, %v53
      %v291 = vmul.f32 %v276, %v283
      %v292 = vadd.f32 %v290, %v291
      %v293 = vtanh.pop %v292
      %v294 = vmul.f32 %v289, %v293
    $region30: #{tpu_custom_call.1} parent=1 // loop_footer
      %s51 = sadd.s32 1, %s47
    $region31: #{tpu_custom_call.1} parent=1 // loop_footer_branch
      %46 = sbr.rel target = $region27
    $region32: #{tpu_custom_call.1} parent=1 // loop_exit
      _
    %v295 = vld [vmem:[%s2] sm:$0xff]
    %v296 = vld [vmem:[%s2 + $0x8] sm:$0xff]
    %v297 = vld [vmem:[%s2 + $0x10] sm:$0xff]
    %v298 = vld [vmem:[%s2 + $0x18] sm:$0xff]
    %v299 = vld [vmem:[%s2 + $0x20] sm:$0xff]
    %v300 = vld [vmem:[%s2 + $0x28] sm:$0xff]
    %v301 = vld [vmem:[%s2 + $0x30] sm:$0xff]
    %v302 = vld [vmem:[%s2 + $0x38] sm:$0xff]
    %v303 = vld [vmem:[%s2 + $0x40] sm:$0xff]
    %v304 = vld [vmem:[%s2 + $0x48] sm:$0xff]
    %v305 = vld [vmem:[%s2 + $0x50] sm:$0xff]
    %v306 = vld [vmem:[%s2 + $0x58] sm:$0xff]
    %v307 = vld [vmem:[%s2 + $0x60] sm:$0xff]
    %v308 = vld [vmem:[%s2 + $0x68] sm:$0xff]
    %v309 = vld [vmem:[%s2 + $0x70] sm:$0xff]
    %v310 = vld [vmem:[%s2 + $0x78] sm:$0xff]
    %v311 = vld [vmem:[%s3] sm:$0x1]
    %v313 = vlaneseq
    %v314 = vshrl.u32 %v313, 7
    %v315 = vsub.s32 0, %v314
    %v316 = vrot.slane %v311, %v315
    %318 = vmatprep.subr.mxu0 0.0
    %319 = vmatpush1.msra.mxu0 %v310
    %320 = vmatprep.subr.mxu0 0.0
    %321 = vmatpush1.msra.mxu0 %v309
    %322 = vmatprep.subr.mxu0 0.0
    %323 = vmatpush1.msra.mxu0 %v308
    %324 = vmatprep.subr.mxu0 0.0
    %325 = vmatpush1.msra.mxu0 %v307
    %326 = vmatprep.subr.mxu0 0.0
    %327 = vmatpush1.msra.mxu0 %v306
    %328 = vmatprep.subr.mxu0 0.0
    %329 = vmatpush1.msra.mxu0 %v305
    %330 = vmatprep.subr.mxu0 0.0
    %331 = vmatpush1.msra.mxu0 %v304
    %332 = vmatprep.subr.mxu0 0.0
    %333 = vmatpush1.msra.mxu0 %v303
    %334 = vmatprep.subr.mxu0 0.0
    %335 = vmatpush1.msra.mxu0 %v302
    %336 = vmatprep.subr.mxu0 0.0
    %337 = vmatpush1.msra.mxu0 %v301
    %338 = vmatprep.subr.mxu0 0.0
    %339 = vmatpush1.msra.mxu0 %v300
    %340 = vmatprep.subr.mxu0 0.0
    %341 = vmatpush1.msra.mxu0 %v299
    %342 = vmatprep.subr.mxu0 0.0
    %343 = vmatpush1.msra.mxu0 %v298
    %344 = vmatprep.subr.mxu0 0.0
    %345 = vmatpush1.msra.mxu0 %v297
    %346 = vmatprep.subr.mxu0 0.0
    %347 = vmatpush1.msra.mxu0 %v296
    %348 = vmatprep.subr.mxu0 0.0
    %349 = vmatpush1.msra.mxu0 %v295
    %350 = vmatprep.subr.mxu0 0.0
    %351 = vmatpush2.msra.mxu0 0.0
    %352 = vmatprep.subr.mxu0 0.0
    %353 = vmatpush2.msra.mxu0 0.0
    %354 = vmatprep.subr.mxu0 0.0
    %355 = vmatpush2.msra.mxu0 0.0
    %356 = vmatprep.subr.mxu0 0.0
    %357 = vmatpush2.msra.mxu0 0.0
    %358 = vmatprep.subr.mxu0 0.0
    %359 = vmatpush2.msra.mxu0 0.0
    %360 = vmatprep.subr.mxu0 0.0
    %361 = vmatpush2.msra.mxu0 0.0
    %362 = vmatprep.subr.mxu0 0.0
    %363 = vmatpush2.msra.mxu0 0.0
    %364 = vmatprep.subr.mxu0 0.0
    %365 = vmatpush2.msra.mxu0 0.0
    %366 = vmatprep.subr.mxu0 0.0
    %367 = vmatpush2.msra.mxu0 0.0
    %368 = vmatprep.subr.mxu0 0.0
    %369 = vmatpush2.msra.mxu0 0.0
    %370 = vmatprep.subr.mxu0 0.0
    %371 = vmatpush2.msra.mxu0 0.0
    %372 = vmatprep.subr.mxu0 0.0
    %373 = vmatpush2.msra.mxu0 0.0
    %374 = vmatprep.subr.mxu0 0.0
    %375 = vmatpush2.msra.mxu0 0.0
    %376 = vmatprep.subr.mxu0 0.0
    %377 = vmatpush2.msra.mxu0 0.0
    %378 = vmatprep.subr.mxu0 0.0
    %379 = vmatpush2.msra.mxu0 0.0
    %380 = vmatprep.subr.mxu0 0.0
    %381 = vmatpush2.msra.mxu0 0.0
    %382 = vmatprep.mubr.f32.mxu0 0.0
    %383 = vmatmul.mubr.f32.gmra.mxu0 %v52
    %v384 = vpop.f32.mrf.mxu0
    %v385 = vadd.f32 %v316, %v384
    %v386 = vpop.f32.mrf.mxu0
    %387 = vdwg.mxu0
    %v388 = vxor.u32 %v385, 2147483648
    %v389 = vmul.f32 %v388, 1.442695
    %v390 = vpow.pop %v389
    %v391 = vadd.f32 %v390, 1.0
    %v392 = vrcp.pop %v391
    %v393 = vmul.f32 1.0, %v392
    %vm394 = vcmask 56320
    %395 = vst.msk [vmem:[#allocation7] sm:$0xff] %vm394, %v393
    // Predicated region
    $region33: #{tpu_custom_call.1} parent=1 // pred_check
      _
    $region34: #{tpu_custom_call.1} parent=1 // pred_check_branch
      %397 = sbr.rel (0) target = $region36
    $region35: #{tpu_custom_call.1} parent=1 // pred_region
      %s399 = ssub.s32 128, 128
      %400 = vsyncadd [#allocation4], %s399
      %s402 = sshll.u32 [#allocation7], 4
      %s403 = int_to_ptr.vmem [resolvable:$true] %s402
      %405 = dma.vmem_to_hbm [thread:$0]  %s403, 128, %s4, [#allocation4]
    $region36: #{tpu_custom_call.1} parent=1 // pred_fallthru
      _
    // Predicated region
    $region37: #{tpu_custom_call.1} parent=1 // pred_check
      _
    $region38: #{tpu_custom_call.1} parent=1 // pred_check_branch
      %407 = sbr.rel (0) target = $region40
    $region39: #{tpu_custom_call.1} parent=1 // pred_region
      %408 = dma.done [#allocation4], 128
    $region40: #{tpu_custom_call.1} parent=1 // pred_fallthru
      _
    %409 = vsyncpa [#allocation3], 1
    %410 = vsyncpa [#allocation6], 1
    %411 = vsyncpa [#allocation4], 1

</llo_original>
